<compile_context>
chip_gen: v7x
topology: tpu7x:2x2x1
jax: 0.10.0
libtpu: 0.0.40
codegen_flags: <defaults>
</compile_context>

<pallas_src>
import functools
import math

import jax
import jax.numpy as jnp
from jax.experimental import pallas as pl
from jax.experimental.pallas import tpu as pltpu


# -----------------------------------------------------------------------------
# Positional table construction (PyTorch __init__ code; deterministic setup,
# stays in plain JAX — not forward-pass compute).
# -----------------------------------------------------------------------------
def make_pos_embedding(emb_size: int, maxlen: int = 5000) -> jnp.ndarray:
    den = jnp.exp(-jnp.arange(0, emb_size, 2, dtype=jnp.float32)
                  * (math.log(10000.0) / emb_size))
    pos = jnp.arange(0, maxlen, dtype=jnp.float32).reshape(maxlen, 1)
    pe = jnp.zeros((maxlen, emb_size), dtype=jnp.float32)
    pe = pe.at[:, 0::2].set(jnp.sin(pos * den))
    pe = pe.at[:, 1::2].set(jnp.cos(pos * den))
    return pe[:, None, :]  # (maxlen, 1, emb_size)


# -----------------------------------------------------------------------------
# Kernel bodies.
#   3-D path : x_ref (TS, B, E), pos_ref (TS, 1, E)  -> sublane-broadcast add
#   2-D path : x_ref (TS, B*E),  pos_ref (TS, E)     -> lane repeat (small E only)
# -----------------------------------------------------------------------------
def _add_pos(x, pos, batch):
    if x.ndim == 3 or pos.shape[-1] == x.shape[-1]:
        return x + pos                                  # implicit broadcast
    return x + jnp.concatenate([pos] * batch, axis=-1)  # small-E fallback only


def _pe_eval_kernel(x_ref, pos_ref, o_ref, *, batch):
    o_ref[...] = _add_pos(x_ref[...], pos_ref[...], batch).astype(o_ref.dtype)


def _pe_train_prng_kernel(seed_ref, x_ref, pos_ref, o_ref, *,
                          batch, keep_threshold, scale):
    y = _add_pos(x_ref[...], pos_ref[...], batch)
    # Per-tile seed: distinct dropout mask for every grid step.
    pltpu.prng_seed(seed_ref[0] + pl.program_id(0))
    bits = pltpu.prng_random_bits(y.shape)
    if bits.dtype != jnp.uint32:      # defensive; usually already uint32
        bits = pltpu.bitcast(bits, jnp.uint32)
    keep = bits >= jnp.uint32(keep_threshold)           # P(keep) = 1 - p
    o_ref[...] = jnp.where(keep, y * scale, 0.0).astype(o_ref.dtype)


def _pe_train_bits_kernel(x_ref, pos_ref, bits_ref, o_ref, *,
                          batch, keep_threshold, scale):
    # TODO(synk): off-TPU fallback only (pltpu.prng_* has no CPU/interpret lowering).
    y = _add_pos(x_ref[...], pos_ref[...], batch)
    keep = bits_ref[...] >= jnp.uint32(keep_threshold)
    o_ref[...] = jnp.where(keep, y * scale, 0.0).astype(o_ref.dtype)


# -----------------------------------------------------------------------------
# Wrapper helpers.
# -----------------------------------------------------------------------------
def _tpu_generation_params():
    kind = ""
    try:
        kind = jax.devices()[0].device_kind.lower()
    except Exception:
        pass
    if "v7" in kind:
        # 3.2 TB/s HBM -> bigger tiles to amortize per-step overhead,
        # but only 64 MiB physical VMEM -> leave headroom.
        return {"target_tile_bytes": 10 << 20, "vmem_cap": 40 << 20}
    if "v5" in kind:
        return {"target_tile_bytes": 4 << 20, "vmem_cap": 48 << 20}
    # v6e / default: 1.4 TB/s HBM, 128 MiB VMEM.
    return {"target_tile_bytes": 6 << 20, "vmem_cap": 48 << 20}


def _choose_row_tile(n_rows: int, row_bytes: int, sublane: int,
                     target_bytes: int, min_steps: int = 4) -> int:
    """Row tile: multiple of the dtype-packed sublane count (or full extent),
    ~target_bytes per tile, >= min_steps grid steps when the work is big enough,
    preferring a divisor of n_rows so the last step is not a masked partial tile."""
    if n_rows <= sublane:
        return n_rows
    ts = target_bytes // max(1, row_bytes)
    ts = max(sublane, (ts // sublane) * sublane)
    ts = min(ts, n_rows)
    # Enough steps for v7x megacore sharding + double buffering (only when
    # splitting the work actually beats the per-step overhead).
    if n_rows >= min_steps * sublane and ts * row_bytes > (1 << 20):
        while ts > sublane and pl.cdiv(n_rows, ts) < min_steps:
            ts = max(sublane, ((ts // 2) // sublane) * sublane)
    if ts >= n_rows:
        return n_rows
    # Snap to a divisor of n_rows within 2x of the chosen tile, if one exists.
    if n_rows % ts != 0:
        cand, lo = ts, max(sublane, ts // 2)
        while cand >= lo:
            if n_rows % cand == 0:
                return cand
            cand -= sublane
    return ts


def _make_spec(block_shape, index_map, buffer_count=None):
    if buffer_count is not None and hasattr(pl, "Buffered"):
        try:
            return pl.BlockSpec(block_shape, index_map,
                                pipeline_mode=pl.Buffered(buffer_count))
        except TypeError:
            pass
    return pl.BlockSpec(block_shape, index_map)


# -----------------------------------------------------------------------------
# Public wrapper: forward(x) = dropout(x + pos_embedding[:S]).
# -----------------------------------------------------------------------------
def positional_encoding(token_embedding: jnp.ndarray,
                        pos_embedding: jnp.ndarray,
                        dropout_p: float,
                        seed: int,
                        train: bool = True) -> jnp.ndarray:
    S, B, E = token_embedding.shape
    dtype = token_embedding.dtype
    itemsize = jnp.dtype(dtype).itemsize

    apply_dropout = bool(train) and float(dropout_p) > 0.0
    if apply_dropout and float(dropout_p) >= 1.0:
        # p == 1: everything dropped (scale would be inf).
        return jnp.zeros_like(token_embedding)

    gen = _tpu_generation_params()
    sublane = max(8, (4 // itemsize) * 8)          # 8 f32 / 16 bf16 / 32 int8
    row_bytes = B * E * itemsize
    TS = _choose_row_tile(S, row_bytes, sublane, gen["target_tile_bytes"])
    grid_steps = pl.cdiv(S, TS)
    grid = (grid_steps,)

    on_tpu = jax.default_backend() == "tpu"
    use_bits_path = apply_dropout and not on_tpu

    use_3d = (E % 128 == 0)
    if use_3d:
        x_in = token_embedding                               # (S, B, E)
        pos_in = pos_embedding[:S].astype(dtype)             # (S, 1, E)
        x_block, pos_block = (TS, B, E), (TS, 1, E)
        x_map = lambda i, *_: (i, 0, 0)
        out_shape = jax.ShapeDtypeStruct((S, B, E), dtype)
    else:
        x_in = token_embedding.reshape(S, B * E)             # lane-dense slab
        pos_in = pos_embedding[:S, 0, :].astype(dtype)       # (S, E)
        x_block, pos_block = (TS, B * E), (TS, E)
        x_map = lambda i, *_: (i, 0)
        out_shape = jax.ShapeDtypeStruct((S, B * E), dtype)

    x_tile_bytes = TS * B * E * itemsize
    pos_tile_bytes = TS * E * itemsize
    bits_tile_bytes = TS * B * E * 4 if use_bits_path else 0

    def _vmem_need(nbuf):
        # nbuf-deep in + out x buffers, double-buffered pos, optional bits,
        # plus ~3 tile-sized in-kernel temporaries (sum, random bits, mask).
        return (2 * nbuf * x_tile_bytes + 2 * pos_tile_bytes
                + nbuf * bits_tile_bytes + 3 * x_tile_bytes)

    headroom = 4 << 20
    use_buf3 = (hasattr(pl, "Buffered") and grid_steps >= 3
                and _vmem_need(3) + headroom <= gen["vmem_cap"])
    nbuf = 3 if use_buf3 else None
    vmem_limit = int(min(gen["vmem_cap"],
                         max(16 << 20, _vmem_need(3 if use_buf3 else 2) + headroom)))

    compiler_params = pltpu.CompilerParams(
        dimension_semantics=("parallel",),        # shard row tiles across TCs
        vmem_limit_bytes=vmem_limit)
    bytes_accessed = (2 * S * B * E * itemsize + S * E * itemsize
                      + (S * B * E * 4 if use_bits_path else 0))
    cost = pl.CostEstimate(flops=(3 if apply_dropout else 1) * S * B * E,
                           transcendentals=0, bytes_accessed=int(bytes_accessed))
    tpu_kwargs = (dict(compiler_params=compiler_params, cost_estimate=cost)
                  if on_tpu else {})

    keep_threshold = min(int(round(float(dropout_p) * (1 << 32))), (1 << 32) - 1)
    scale = 1.0 / (1.0 - float(dropout_p)) if apply_dropout else 1.0

    x_spec = _make_spec(x_block, x_map, nbuf)
    pos_spec = _make_spec(pos_block, x_map)       # tiny; default buffering
    out_spec = _make_spec(x_block, x_map, nbuf)

    if not apply_dropout:
        kernel = functools.partial(_pe_eval_kernel, batch=B)
        out = pl.pallas_call(
            kernel, out_shape=out_shape, grid=grid,
            in_specs=[x_spec, pos_spec], out_specs=out_spec, **tpu_kwargs,
        )(x_in, pos_in)
    elif not use_bits_path:
        kernel = functools.partial(_pe_train_prng_kernel, batch=B,
                                   keep_threshold=keep_threshold, scale=scale)
        grid_spec = pltpu.PrefetchScalarGridSpec(
            num_scalar_prefetch=1, grid=grid,
            in_specs=[x_spec, pos_spec], out_specs=out_spec)
        out = pl.pallas_call(
            kernel, out_shape=out_shape, grid_spec=grid_spec, **tpu_kwargs,
        )(jnp.asarray([seed], dtype=jnp.int32), x_in, pos_in)
    else:
        bits = jax.random.bits(jax.random.PRNGKey(int(seed)),
                               x_in.shape, dtype=jnp.uint32)
        bits_spec = _make_spec(x_block, x_map, nbuf)
        kernel = functools.partial(_pe_train_bits_kernel, batch=B,
                                   keep_threshold=keep_threshold, scale=scale)
        out = pl.pallas_call(
            kernel, out_shape=out_shape, grid=grid,
            in_specs=[x_spec, pos_spec, bits_spec], out_specs=out_spec, **tpu_kwargs,
        )(x_in, pos_in, bits)

    return out.reshape(S, B, E)


if __name__ == "__main__":
    dropout = 0.1
    maxlen = 5000
    key = jax.random.PRNGKey(0)

    cases = [
        (8, 2, 32),     # small-E lane-dense 2-D path
        (16, 2, 128),   # E % 128 == 0  -> 3-D sublane-broadcast path
    ]
    for idx, (seq_len, batch, emb_size) in enumerate(cases):
        k = jax.random.fold_in(key, idx)
        x = jax.random.normal(k, (seq_len, batch, emb_size), dtype=jnp.float32)
        pos_embedding = make_pos_embedding(emb_size, maxlen)
        ref = x + pos_embedding[:seq_len]

        # Eval mode: dropout is identity -> must equal x + pos exactly.
        out_eval = jax.block_until_ready(
            positional_encoding(x, pos_embedding, dropout, seed=0, train=False))
        assert out_eval.shape == (seq_len, batch, emb_size)
        assert jnp.allclose(out_eval, ref, atol=1e-6), "eval-mode mismatch"

        # Train mode: inverted dropout. Kept elements are ref/(1-p), dropped are 0.
        out_train = jax.block_until_ready(
            positional_encoding(x, pos_embedding, dropout, seed=1234, train=True))
        assert out_train.shape == (seq_len, batch, emb_size)
        expected_kept = jnp.where(out_train != 0, ref * (1.0 / (1.0 - dropout)), 0.0)
        assert jnp.allclose(out_train, expected_kept, atol=1e-5, rtol=1e-5), \
            "train-mode dropout scaling mismatch"
        drop_frac = float(jnp.mean((out_train == 0).astype(jnp.float32)))
        assert 0.0 < drop_frac < 0.5, f"dropout fraction looks wrong: {drop_frac}"

    print("KERNEL_OK")
</pallas_src>

<mosaic_0001>
module attributes {stable_mosaic.version = 11 : i64} {
  func.func @_pe_eval_kernel(%arg0: i32, %arg1: memref<8x64xf32, #tpu.memory_space<vmem>>, %arg2: memref<8x32xf32, #tpu.memory_space<vmem>>, %arg3: memref<8x64xf32, #tpu.memory_space<vmem>>) attributes {dimension_semantics = [#tpu.dimension_semantics<arbitrary>], iteration_bounds = array<i64: 1>, scalar_prefetch = 0 : i64, scratch_operands = 0 : i64, tpu.core_type = #tpu.core_type<tc>, window_params = [{transform_indices = @transform_0, window_bounds = array<i64: 8, 64>}, {transform_indices = @transform_1, window_bounds = array<i64: 8, 32>}, {transform_indices = @transform_2, window_bounds = array<i64: 8, 64>}]} {
    %c0 = arith.constant 0 : index
    %c0_0 = arith.constant 0 : index
    %0 = vector.load %arg1[%c0, %c0_0] : memref<8x64xf32, #tpu.memory_space<vmem>>, vector<8x64xf32>
    %c0_1 = arith.constant 0 : index
    %c0_2 = arith.constant 0 : index
    %1 = vector.load %arg2[%c0_1, %c0_2] : memref<8x32xf32, #tpu.memory_space<vmem>>, vector<8x32xf32>
    %2 = tpu.concatenate %1, %1 in 1 : vector<8x32xf32>, vector<8x32xf32> -> vector<8x64xf32>
    %3 = arith.addf %0, %2 : vector<8x64xf32>
    %c0_3 = arith.constant 0 : index
    %c0_4 = arith.constant 0 : index
    %4 = vector.load %arg3[%c0_3, %c0_4] : memref<8x64xf32, #tpu.memory_space<vmem>>, vector<8x64xf32>
    tpu.vector_store %arg3[%c0_3, %c0_4], %3 {strides = array<i32>} : memref<8x64xf32, #tpu.memory_space<vmem>>, vector<8x64xf32>,
    return
  }
  func.func @transform_0(%arg0: i32) -> (i32, i32) {
    %c0_i32 = arith.constant 0 : i32
    %c0_i32_0 = arith.constant 0 : i32
    return %arg0, %c0_i32 : i32, i32
  }
  func.func @transform_1(%arg0: i32) -> (i32, i32) {
    %c0_i32 = arith.constant 0 : i32
    %c0_i32_0 = arith.constant 0 : i32
    return %arg0, %c0_i32 : i32, i32
  }
  func.func @transform_2(%arg0: i32) -> (i32, i32) {
    %c0_i32 = arith.constant 0 : i32
    %c0_i32_0 = arith.constant 0 : i32
    return %arg0, %c0_i32 : i32, i32
  }
}

</mosaic_0001>

<llo_original>
// kernel: tpu_custom_call.1
$region0: #{tpu_custom_call.1}
  #allocation0 [shape = 'u32[]', space=smem, size = 0x4, offset = 0x4, fixed_abs, tag = 'smem constant byte address 0x4 - core index']
  #allocation1 [shape = 'u32[144,128]{1,0:T(1,128)}', space=vmem, size = 0x12000, scoped, tag = 'internal scratch']
  %s0 = inlined_call_operand.hbm [shape: f32[8,64], index: 0, kind: input, shape index: {}]
  %s1 = inlined_call_operand.hbm [shape: f32[8,32], index: 1, kind: input, shape index: {}]
  %s2 = inlined_call_operand.hbm [shape: f32[8,64], index: 2, kind: output, shape index: {}]
  %s3 = sld [smem:[#allocation0]]
  $region26: #{tpu_custom_call.1} parent=0
    _
  %s5 = ssub.s32 1, %s3
  %s6 = scalar_select 0, %s5, %s3
  $region1: #{tpu_custom_call.1} parent=0
    #allocation2 [shape = 'u8[4096]{0}', space=vmem, size = 0x1000, scoped, tag = 'input window, operand 0, single buffered']
    #allocation3 [shape = 's32[1]{0}', space=sflag, size = 0x4, scoped, tag = 'scoped memory for tpu_custom_call.1']
    #allocation4 [shape = 's32[1]{0}', space=sflag, size = 0x4, scoped, tag = 'scoped memory for tpu_custom_call.1']
    #allocation5 [shape = 'u8[4096]{0}', space=vmem, size = 0x1000, scoped, tag = 'input window, operand 1, single buffered']
    #allocation6 [shape = 's32[1]{0}', space=sflag, size = 0x4, scoped, tag = 'scoped memory for tpu_custom_call.1']
    #allocation7 [shape = 'u8[4096]{0}', space=vmem, size = 0x1000, scoped, tag = 'output window, operand 0, single buffered']
    %7 = vsyncpa [#allocation3], 0
    %8 = vsyncpa [#allocation6], 0
    %9 = vsyncpa [#allocation4], 0
    // Predicated region
    $region2: #{tpu_custom_call.1} parent=1 // pred_check
      _
    $region3: #{tpu_custom_call.1} parent=1 // pred_check_branch
      %11 = sbr.rel (0) target = $region5
    $region4: #{tpu_custom_call.1} parent=1 // pred_region
      %s13 = ssub.s32 128, 128
      %14 = vsyncadd [#allocation3], %s13
      %s16 = sshll.u32 [#allocation2], 4
      %s17 = int_to_ptr.vmem [resolvable:$true] %s16
      %19 = dma.hbm_to_vmem [thread:$0]  %s0, 128, %s17, [#allocation3]
    $region5: #{tpu_custom_call.1} parent=1 // pred_fallthru
      _
    // Predicated region
    $region6: #{tpu_custom_call.1} parent=1 // pred_check
      _
    $region7: #{tpu_custom_call.1} parent=1 // pred_check_branch
      %21 = sbr.rel (0) target = $region9
    $region8: #{tpu_custom_call.1} parent=1 // pred_region
      %s23 = ssub.s32 128, 128
      %24 = vsyncadd [#allocation6], %s23
      %s26 = sshll.u32 [#allocation5], 4
      %s27 = int_to_ptr.vmem [resolvable:$true] %s26
      %29 = dma.hbm_to_vmem [thread:$0]  %s1, 128, %s27, [#allocation6]
    $region9: #{tpu_custom_call.1} parent=1 // pred_fallthru
      _
    // Predicated region
    $region10: #{tpu_custom_call.1} parent=1 // pred_check
      _
    $region11: #{tpu_custom_call.1} parent=1 // pred_check_branch
      %31 = sbr.rel (0) target = $region13
    $region12: #{tpu_custom_call.1} parent=1 // pred_region
      %32 = dma.done [#allocation3], 128
    $region13: #{tpu_custom_call.1} parent=1 // pred_fallthru
      _
    // Predicated region
    $region14: #{tpu_custom_call.1} parent=1 // pred_check
      _
    $region15: #{tpu_custom_call.1} parent=1 // pred_check_branch
      %34 = sbr.rel (0) target = $region17
    $region16: #{tpu_custom_call.1} parent=1 // pred_region
      %35 = dma.done [#allocation6], 128
    $region17: #{tpu_custom_call.1} parent=1 // pred_fallthru
      _
    %v36 = vld [vmem:[#allocation2] sm:$0xff]
    %v37 = vld [vmem:[#allocation5] sm:$0xff]
    %39 = vrot.lane.b32.xlu0 %v37, 32
    %v40 = vpop.permute.xlu0 %39
    %vm42 = vcmask 261120
    %v43 = vsel %vm42, %v37, %v40
    %v44 = vadd.f32 %v36, %v43
    %vm45 = vcmask 523264
    %46 = vst.msk [vmem:[#allocation7] sm:$0xff] %vm45, %v44
    // Predicated region
    $region18: #{tpu_custom_call.1} parent=1 // pred_check
      _
    $region19: #{tpu_custom_call.1} parent=1 // pred_check_branch
      %48 = sbr.rel (0) target = $region21
    $region20: #{tpu_custom_call.1} parent=1 // pred_region
      %s50 = ssub.s32 128, 128
      %51 = vsyncadd [#allocation4], %s50
      %s53 = sshll.u32 [#allocation7], 4
      %s54 = int_to_ptr.vmem [resolvable:$true] %s53
      %56 = dma.vmem_to_hbm [thread:$0]  %s54, 128, %s2, [#allocation4]
    $region21: #{tpu_custom_call.1} parent=1 // pred_fallthru
      _
    // Predicated region
    $region22: #{tpu_custom_call.1} parent=1 // pred_check
      _
    $region23: #{tpu_custom_call.1} parent=1 // pred_check_branch
      %58 = sbr.rel (0) target = $region25
    $region24: #{tpu_custom_call.1} parent=1 // pred_region
      %59 = dma.done [#allocation4], 128
    $region25: #{tpu_custom_call.1} parent=1 // pred_fallthru
      _
    %60 = vsyncpa [#allocation3], 1
    %61 = vsyncpa [#allocation6], 1
    %62 = vsyncpa [#allocation4], 1

</llo_original>
